<compile_context>
chip_gen: v7x
topology: tpu7x:2x2x1
jax: 0.10.0
libtpu: 0.0.40
codegen_flags: <defaults>
</compile_context>

<pallas_src>
import math
from functools import partial

import jax
import jax.numpy as jnp
from jax.experimental import pallas as pl
from jax.experimental.pallas import tpu as pltpu

STATE_DIM = 24
ACTION_DIM = 4
HIDDEN = 96
FF = 192
LN_EPS = 1e-5

MAX_TB = 512  # batch rows per grid step (multiple of 8); sweepable 256-2048


def _layernorm(x, gamma, beta):
    mean = jnp.mean(x, axis=-1, keepdims=True)
    var = jnp.mean(jnp.square(x - mean), axis=-1, keepdims=True)
    inv = jax.lax.rsqrt(var + LN_EPS)
    return (x - mean) * inv * gamma + beta


def actor_kernel(
    x_ref,
    w1_ref, b1_ref, g1_ref, be1_ref,
    w2_ref, b2_ref,
    w3_ref, b3_ref,
    g2_ref, be2_ref,
    wfc_ref, bfc_ref,
    out_ref,
):
    x = x_ref[...].astype(jnp.float32)                       # [tb, state_dim]

    # lin1 -> LayerNorm -> tanh
    h = jnp.dot(x, w1_ref[...], preferred_element_type=jnp.float32) + b1_ref[...]
    h = _layernorm(h, g1_ref[...], be1_ref[...])
    h = jnp.tanh(h)                                          # [tb, 96]

    # lin2 -> GELU (exact, erf-based, matches PyTorch nn.GELU) -> lin3
    ff = jnp.dot(h, w2_ref[...], preferred_element_type=jnp.float32) + b2_ref[...]
    ff = 0.5 * ff * (1.0 + jax.lax.erf(ff * jnp.float32(1.0 / math.sqrt(2.0))))
    xx = jnp.dot(ff, w3_ref[...], preferred_element_type=jnp.float32) + b3_ref[...]

    # residual + LayerNorm
    o = _layernorm(h + xx, g2_ref[...], be2_ref[...])        # [tb, 96]

    # fc head -> tanh
    a = jnp.dot(o, wfc_ref[...], preferred_element_type=jnp.float32) + bfc_ref[...]
    out_ref[...] = jnp.tanh(a).astype(out_ref.dtype)         # [tb, action_dim]


@jax.jit
def actor_forward(state, params):
    n = state.shape[0]

    # Batch tile: multiple of 8 (f32 sublane). Small batches get one tile that
    # exactly covers them (rounded up to 8); large batches are tiled at MAX_TB.
    tb = MAX_TB if n >= MAX_TB else max(8, ((n + 7) // 8) * 8)
    n_pad = pl.cdiv(n, tb) * tb

    x = state
    if n_pad != n:
        # Zero-pad extra rows; every op is row-independent so padded rows are
        # harmless and are sliced off below.
        x = jnp.pad(state, ((0, n_pad - n), (0, 0)))

    weights = (
        params["w1"], params["b1"], params["g1"], params["be1"],
        params["w2"], params["b2"],
        params["w3"], params["b3"],
        params["g2"], params["be2"],
        params["wfc"], params["bfc"],
    )

    # x / out are tiled over the batch grid; all params use a constant index_map
    # so they are DMA'd once and stay resident in VMEM across grid steps.
    x_spec = pl.BlockSpec((tb, STATE_DIM), lambda i: (i, 0))
    w_specs = [pl.BlockSpec(w.shape, lambda i: (0, 0)) for w in weights]
    out_spec = pl.BlockSpec((tb, ACTION_DIM), lambda i: (i, 0))

    out = pl.pallas_call(
        actor_kernel,
        out_shape=jax.ShapeDtypeStruct((n_pad, ACTION_DIM), jnp.float32),
        grid=(n_pad // tb,),
        in_specs=[x_spec] + w_specs,
        out_specs=out_spec,
        compiler_params=pltpu.CompilerParams(
            dimension_semantics=("parallel",),   # shards batch steps across TCs on v7x
        ),
    )(x, *weights)

    return out[:n]


def _xavier_uniform(key, fan_in, fan_out, gain):
    bound = gain * math.sqrt(6.0 / (fan_in + fan_out))
    # stored as [in, out] (transposed from PyTorch's [out, in])
    return jax.random.uniform(key, (fan_in, fan_out), jnp.float32, -bound, bound)


def _linear_bias(key, fan_in, fan_out):
    # PyTorch nn.Linear default bias init: U(-1/sqrt(fan_in), 1/sqrt(fan_in))
    bound = 1.0 / math.sqrt(fan_in)
    return jax.random.uniform(key, (1, fan_out), jnp.float32, -bound, bound)


def init_actor_params(key):
    ks = jax.random.split(key, 8)
    gain_tanh = 5.0 / 3.0
    gain_relu = math.sqrt(2.0)
    params = {
        # FeedForwardEncoder
        "w1": _xavier_uniform(ks[0], STATE_DIM, HIDDEN, gain_tanh),
        "b1": _linear_bias(ks[1], STATE_DIM, HIDDEN),
        "g1": jnp.ones((1, HIDDEN), jnp.float32),
        "be1": jnp.zeros((1, HIDDEN), jnp.float32),
        "w2": _xavier_uniform(ks[2], HIDDEN, FF, gain_relu),
        "b2": _linear_bias(ks[3], HIDDEN, FF),
        "w3": _xavier_uniform(ks[4], FF, HIDDEN, gain_relu),
        "b3": _linear_bias(ks[5], FF, HIDDEN),
        "g2": jnp.ones((1, HIDDEN), jnp.float32),
        "be2": jnp.zeros((1, HIDDEN), jnp.float32),
        # fc head: U(-0.003, 0.003) weight, zero bias
        "wfc": jax.random.uniform(ks[6], (HIDDEN, ACTION_DIM), jnp.float32, -0.003, 0.003),
        "bfc": jnp.zeros((1, ACTION_DIM), jnp.float32),
    }
    return params


def actor_reference(state, params):
    """Plain-JAX reference of the same forward pass (for sanity check)."""
    h = state @ params["w1"] + params["b1"]
    h = _layernorm(h, params["g1"], params["be1"])
    h = jnp.tanh(h)
    ff = jax.nn.gelu(h @ params["w2"] + params["b2"], approximate=False)
    xx = ff @ params["w3"] + params["b3"]
    o = _layernorm(h + xx, params["g2"], params["be2"])
    return jnp.tanh(o @ params["wfc"] + params["bfc"])


if __name__ == "__main__":
    key = jax.random.PRNGKey(0)
    pkey, skey1, skey2 = jax.random.split(key, 3)
    params = init_actor_params(pkey)

    # Small "serving" batch (single grid step, padded to sublane multiple).
    batch_small = 8
    state_small = jax.random.normal(skey1, (batch_small, STATE_DIM), jnp.float32)
    act_small = actor_forward(state_small, params)
    jax.block_until_ready(act_small)
    ref_small = actor_reference(state_small, params)
    assert act_small.shape == (batch_small, ACTION_DIM)
    assert jnp.allclose(act_small, ref_small, atol=1e-5, rtol=1e-5), "small-batch mismatch"

    # Larger batch: exercises the batch grid (2 steps at TB=512) + padded tail.
    batch_big = 1000
    state_big = jax.random.normal(skey2, (batch_big, STATE_DIM), jnp.float32)
    act_big = actor_forward(state_big, params)
    jax.block_until_ready(act_big)
    ref_big = actor_reference(state_big, params)
    assert act_big.shape == (batch_big, ACTION_DIM)
    assert jnp.allclose(act_big, ref_big, atol=1e-5, rtol=1e-5), "big-batch mismatch"

    # TODO(synk): stochastic=True branch (rsample + log_prob/entropy) not implemented;
    # default Actor(stochastic=False) forward is fully covered.
    print("KERNEL_OK")
</pallas_src>

<mosaic_0001>
module attributes {stable_mosaic.version = 11 : i64} {
  func.func @actor_kernel(%arg0: i32, %arg1: memref<8x24xf32, #tpu.memory_space<vmem>>, %arg2: memref<24x96xf32, #tpu.memory_space<vmem>>, %arg3: memref<1x96xf32, #tpu.memory_space<vmem>>, %arg4: memref<1x96xf32, #tpu.memory_space<vmem>>, %arg5: memref<1x96xf32, #tpu.memory_space<vmem>>, %arg6: memref<96x192xf32, #tpu.memory_space<vmem>>, %arg7: memref<1x192xf32, #tpu.memory_space<vmem>>, %arg8: memref<192x96xf32, #tpu.memory_space<vmem>>, %arg9: memref<1x96xf32, #tpu.memory_space<vmem>>, %arg10: memref<1x96xf32, #tpu.memory_space<vmem>>, %arg11: memref<1x96xf32, #tpu.memory_space<vmem>>, %arg12: memref<96x4xf32, #tpu.memory_space<vmem>>, %arg13: memref<1x4xf32, #tpu.memory_space<vmem>>, %arg14: memref<8x4xf32, #tpu.memory_space<vmem>>) attributes {dimension_semantics = [#tpu.dimension_semantics<parallel>], iteration_bounds = array<i64: 1>, scalar_prefetch = 0 : i64, scratch_operands = 0 : i64, tpu.core_type = #tpu.core_type<tc>, window_params = [{transform_indices = @transform_0, window_bounds = array<i64: 8, 24>}, {pipeline_mode = #tpu.pipeline_mode<synchronous>, transform_indices = @transform_1, window_bounds = array<i64: 24, 96>}, {pipeline_mode = #tpu.pipeline_mode<synchronous>, transform_indices = @transform_2, window_bounds = array<i64: 1, 96>}, {pipeline_mode = #tpu.pipeline_mode<synchronous>, transform_indices = @transform_3, window_bounds = array<i64: 1, 96>}, {pipeline_mode = #tpu.pipeline_mode<synchronous>, transform_indices = @transform_4, window_bounds = array<i64: 1, 96>}, {pipeline_mode = #tpu.pipeline_mode<synchronous>, transform_indices = @transform_5, window_bounds = array<i64: 96, 192>}, {pipeline_mode = #tpu.pipeline_mode<synchronous>, transform_indices = @transform_6, window_bounds = array<i64: 1, 192>}, {pipeline_mode = #tpu.pipeline_mode<synchronous>, transform_indices = @transform_7, window_bounds = array<i64: 192, 96>}, {pipeline_mode = #tpu.pipeline_mode<synchronous>, transform_indices = @transform_8, window_bounds = array<i64: 1, 96>}, {pipeline_mode = #tpu.pipeline_mode<synchronous>, transform_indices = @transform_9, window_bounds = array<i64: 1, 96>}, {pipeline_mode = #tpu.pipeline_mode<synchronous>, transform_indices = @transform_10, window_bounds = array<i64: 1, 96>}, {pipeline_mode = #tpu.pipeline_mode<synchronous>, transform_indices = @transform_11, window_bounds = array<i64: 96, 4>}, {pipeline_mode = #tpu.pipeline_mode<synchronous>, transform_indices = @transform_12, window_bounds = array<i64: 1, 4>}, {transform_indices = @transform_13, window_bounds = array<i64: 8, 4>}]} {
    %c0 = arith.constant 0 : index
    %c0_0 = arith.constant 0 : index
    %0 = vector.load %arg1[%c0, %c0_0] : memref<8x24xf32, #tpu.memory_space<vmem>>, vector<8x24xf32>
    %c0_1 = arith.constant 0 : index
    %c0_2 = arith.constant 0 : index
    %1 = vector.load %arg2[%c0_1, %c0_2] : memref<24x96xf32, #tpu.memory_space<vmem>>, vector<24x96xf32>
    %cst = arith.constant dense<0.000000e+00> : vector<8x96xf32>
    %2 = tpu.matmul %0, %1, %cst {dimension_numbers = #tpu.dot_dimension_numbers<[1], [0], [0], [1], [0, 0, 1, 1], [], []>} : vector<8x24xf32>, vector<24x96xf32>, vector<8x96xf32> -> vector<8x96xf32>
    %c0_3 = arith.constant 0 : index
    %c0_4 = arith.constant 0 : index
    %3 = vector.load %arg3[%c0_3, %c0_4] : memref<1x96xf32, #tpu.memory_space<vmem>>, vector<1x96xf32>
    %4 = vector.broadcast %3 : vector<1x96xf32> to vector<8x96xf32>
    %5 = arith.addf %2, %4 : vector<8x96xf32>
    %c0_5 = arith.constant 0 : index
    %c0_6 = arith.constant 0 : index
    %6 = vector.load %arg4[%c0_5, %c0_6] : memref<1x96xf32, #tpu.memory_space<vmem>>, vector<1x96xf32>
    %c0_7 = arith.constant 0 : index
    %c0_8 = arith.constant 0 : index
    %7 = vector.load %arg5[%c0_7, %c0_8] : memref<1x96xf32, #tpu.memory_space<vmem>>, vector<1x96xf32>
    %cst_9 = arith.constant dense<0.000000e+00> : vector<8xf32>
    %8 = vector.multi_reduction <add>, %5, %cst_9 [1] : vector<8x96xf32> to vector<8xf32>
    %9 = vector.shape_cast %8 : vector<8xf32> to vector<8x1xf32>
    %cst_10 = arith.constant 9.600000e+01 : f32
    %10 = vector.broadcast %cst_10 : f32 to vector<8x1xf32>
    %11 = arith.divf %9, %10 : vector<8x1xf32>
    %12 = vector.broadcast %11 : vector<8x1xf32> to vector<8x96xf32>
    %13 = arith.subf %5, %12 : vector<8x96xf32>
    %14 = arith.mulf %13, %13 : vector<8x96xf32>
    %cst_11 = arith.constant dense<0.000000e+00> : vector<8xf32>
    %15 = vector.multi_reduction <add>, %14, %cst_11 [1] : vector<8x96xf32> to vector<8xf32>
    %16 = vector.shape_cast %15 : vector<8xf32> to vector<8x1xf32>
    %cst_12 = arith.constant 9.600000e+01 : f32
    %17 = vector.broadcast %cst_12 : f32 to vector<8x1xf32>
    %18 = arith.divf %16, %17 : vector<8x1xf32>
    %cst_13 = arith.constant 9.99999974E-6 : f32
    %19 = vector.broadcast %cst_13 : f32 to vector<8x1xf32>
    %20 = arith.addf %18, %19 : vector<8x1xf32>
    %21 = math.rsqrt %20 : vector<8x1xf32>
    %22 = vector.broadcast %11 : vector<8x1xf32> to vector<8x96xf32>
    %23 = arith.subf %5, %22 : vector<8x96xf32>
    %24 = vector.broadcast %21 : vector<8x1xf32> to vector<8x96xf32>
    %25 = arith.mulf %23, %24 : vector<8x96xf32>
    %26 = vector.broadcast %6 : vector<1x96xf32> to vector<8x96xf32>
    %27 = arith.mulf %25, %26 : vector<8x96xf32>
    %28 = vector.broadcast %7 : vector<1x96xf32> to vector<8x96xf32>
    %29 = arith.addf %27, %28 : vector<8x96xf32>
    %30 = math.tanh %29 : vector<8x96xf32>
    %c0_14 = arith.constant 0 : index
    %c0_15 = arith.constant 0 : index
    %31 = vector.load %arg6[%c0_14, %c0_15] : memref<96x192xf32, #tpu.memory_space<vmem>>, vector<96x192xf32>
    %cst_16 = arith.constant dense<0.000000e+00> : vector<8x192xf32>
    %32 = tpu.matmul %30, %31, %cst_16 {dimension_numbers = #tpu.dot_dimension_numbers<[1], [0], [0], [1], [0, 0, 1, 1], [], []>} : vector<8x96xf32>, vector<96x192xf32>, vector<8x192xf32> -> vector<8x192xf32>
    %c0_17 = arith.constant 0 : index
    %c0_18 = arith.constant 0 : index
    %33 = vector.load %arg7[%c0_17, %c0_18] : memref<1x192xf32, #tpu.memory_space<vmem>>, vector<1x192xf32>
    %34 = vector.broadcast %33 : vector<1x192xf32> to vector<8x192xf32>
    %35 = arith.addf %32, %34 : vector<8x192xf32>
    %cst_19 = arith.constant 5.000000e-01 : f32
    %36 = vector.broadcast %cst_19 : f32 to vector<8x192xf32>
    %37 = arith.mulf %36, %35 : vector<8x192xf32>
    %cst_20 = arith.constant 0.707106769 : f32
    %38 = vector.broadcast %cst_20 : f32 to vector<8x192xf32>
    %39 = arith.mulf %35, %38 : vector<8x192xf32>
    %40 = math.erf %39 : vector<8x192xf32>
    %cst_21 = arith.constant 1.000000e+00 : f32
    %41 = vector.broadcast %cst_21 : f32 to vector<8x192xf32>
    %42 = arith.addf %41, %40 : vector<8x192xf32>
    %43 = arith.mulf %37, %42 : vector<8x192xf32>
    %c0_22 = arith.constant 0 : index
    %c0_23 = arith.constant 0 : index
    %44 = vector.load %arg8[%c0_22, %c0_23] : memref<192x96xf32, #tpu.memory_space<vmem>>, vector<192x96xf32>
    %cst_24 = arith.constant dense<0.000000e+00> : vector<8x96xf32>
    %45 = tpu.matmul %43, %44, %cst_24 {dimension_numbers = #tpu.dot_dimension_numbers<[1], [0], [0], [1], [0, 0, 1, 1], [], []>} : vector<8x192xf32>, vector<192x96xf32>, vector<8x96xf32> -> vector<8x96xf32>
    %c0_25 = arith.constant 0 : index
    %c0_26 = arith.constant 0 : index
    %46 = vector.load %arg9[%c0_25, %c0_26] : memref<1x96xf32, #tpu.memory_space<vmem>>, vector<1x96xf32>
    %47 = vector.broadcast %46 : vector<1x96xf32> to vector<8x96xf32>
    %48 = arith.addf %45, %47 : vector<8x96xf32>
    %49 = arith.addf %30, %48 : vector<8x96xf32>
    %c0_27 = arith.constant 0 : index
    %c0_28 = arith.constant 0 : index
    %50 = vector.load %arg10[%c0_27, %c0_28] : memref<1x96xf32, #tpu.memory_space<vmem>>, vector<1x96xf32>
    %c0_29 = arith.constant 0 : index
    %c0_30 = arith.constant 0 : index
    %51 = vector.load %arg11[%c0_29, %c0_30] : memref<1x96xf32, #tpu.memory_space<vmem>>, vector<1x96xf32>
    %cst_31 = arith.constant dense<0.000000e+00> : vector<8xf32>
    %52 = vector.multi_reduction <add>, %49, %cst_31 [1] : vector<8x96xf32> to vector<8xf32>
    %53 = vector.shape_cast %52 : vector<8xf32> to vector<8x1xf32>
    %cst_32 = arith.constant 9.600000e+01 : f32
    %54 = vector.broadcast %cst_32 : f32 to vector<8x1xf32>
    %55 = arith.divf %53, %54 : vector<8x1xf32>
    %56 = vector.broadcast %55 : vector<8x1xf32> to vector<8x96xf32>
    %57 = arith.subf %49, %56 : vector<8x96xf32>
    %58 = arith.mulf %57, %57 : vector<8x96xf32>
    %cst_33 = arith.constant dense<0.000000e+00> : vector<8xf32>
    %59 = vector.multi_reduction <add>, %58, %cst_33 [1] : vector<8x96xf32> to vector<8xf32>
    %60 = vector.shape_cast %59 : vector<8xf32> to vector<8x1xf32>
    %cst_34 = arith.constant 9.600000e+01 : f32
    %61 = vector.broadcast %cst_34 : f32 to vector<8x1xf32>
    %62 = arith.divf %60, %61 : vector<8x1xf32>
    %cst_35 = arith.constant 9.99999974E-6 : f32
    %63 = vector.broadcast %cst_35 : f32 to vector<8x1xf32>
    %64 = arith.addf %62, %63 : vector<8x1xf32>
    %65 = math.rsqrt %64 : vector<8x1xf32>
    %66 = vector.broadcast %55 : vector<8x1xf32> to vector<8x96xf32>
    %67 = arith.subf %49, %66 : vector<8x96xf32>
    %68 = vector.broadcast %65 : vector<8x1xf32> to vector<8x96xf32>
    %69 = arith.mulf %67, %68 : vector<8x96xf32>
    %70 = vector.broadcast %50 : vector<1x96xf32> to vector<8x96xf32>
    %71 = arith.mulf %69, %70 : vector<8x96xf32>
    %72 = vector.broadcast %51 : vector<1x96xf32> to vector<8x96xf32>
    %73 = arith.addf %71, %72 : vector<8x96xf32>
    %c0_36 = arith.constant 0 : index
    %c0_37 = arith.constant 0 : index
    %74 = vector.load %arg12[%c0_36, %c0_37] : memref<96x4xf32, #tpu.memory_space<vmem>>, vector<96x4xf32>
    %cst_38 = arith.constant dense<0.000000e+00> : vector<8x4xf32>
    %75 = tpu.matmul %73, %74, %cst_38 {dimension_numbers = #tpu.dot_dimension_numbers<[1], [0], [0], [1], [0, 0, 1, 1], [], []>} : vector<8x96xf32>, vector<96x4xf32>, vector<8x4xf32> -> vector<8x4xf32>
    %c0_39 = arith.constant 0 : index
    %c0_40 = arith.constant 0 : index
    %76 = vector.load %arg13[%c0_39, %c0_40] : memref<1x4xf32, #tpu.memory_space<vmem>>, vector<1x4xf32>
    %77 = vector.broadcast %76 : vector<1x4xf32> to vector<8x4xf32>
    %78 = arith.addf %75, %77 : vector<8x4xf32>
    %79 = math.tanh %78 : vector<8x4xf32>
    %c0_41 = arith.constant 0 : index
    %c0_42 = arith.constant 0 : index
    %80 = vector.load %arg14[%c0_41, %c0_42] : memref<8x4xf32, #tpu.memory_space<vmem>>, vector<8x4xf32>
    tpu.vector_store %arg14[%c0_41, %c0_42], %79 {strides = array<i32>} : memref<8x4xf32, #tpu.memory_space<vmem>>, vector<8x4xf32>,
    return
  }
  func.func @transform_0(%arg0: i32) -> (i32, i32) {
    %c0_i32 = arith.constant 0 : i32
    %c0_i32_0 = arith.constant 0 : i32
    return %arg0, %c0_i32 : i32, i32
  }
  func.func @transform_1(%arg0: i32) -> (i32, i32) {
    %c0_i32 = arith.constant 0 : i32
    %c0_i32_0 = arith.constant 0 : i32
    %c0_i32_1 = arith.constant 0 : i32
    return %c0_i32, %c0_i32_0 : i32, i32
  }
  func.func @transform_2(%arg0: i32) -> (i32, i32) {
    %c0_i32 = arith.constant 0 : i32
    %c0_i32_0 = arith.constant 0 : i32
    %c0_i32_1 = arith.constant 0 : i32
    return %c0_i32, %c0_i32_0 : i32, i32
  }
  func.func @transform_3(%arg0: i32) -> (i32, i32) {
    %c0_i32 = arith.constant 0 : i32
    %c0_i32_0 = arith.constant 0 : i32
    %c0_i32_1 = arith.constant 0 : i32
    return %c0_i32, %c0_i32_0 : i32, i32
  }
  func.func @transform_4(%arg0: i32) -> (i32, i32) {
    %c0_i32 = arith.constant 0 : i32
    %c0_i32_0 = arith.constant 0 : i32
    %c0_i32_1 = arith.constant 0 : i32
    return %c0_i32, %c0_i32_0 : i32, i32
  }
  func.func @transform_5(%arg0: i32) -> (i32, i32) {
    %c0_i32 = arith.constant 0 : i32
    %c0_i32_0 = arith.constant 0 : i32
    %c0_i32_1 = arith.constant 0 : i32
    return %c0_i32, %c0_i32_0 : i32, i32
  }
  func.func @transform_6(%arg0: i32) -> (i32, i32) {
    %c0_i32 = arith.constant 0 : i32
    %c0_i32_0 = arith.constant 0 : i32
    %c0_i32_1 = arith.constant 0 : i32
    return %c0_i32, %c0_i32_0 : i32, i32
  }
  func.func @transform_7(%arg0: i32) -> (i32, i32) {
    %c0_i32 = arith.constant 0 : i32
    %c0_i32_0 = arith.constant 0 : i32
    %c0_i32_1 = arith.constant 0 : i32
    return %c0_i32, %c0_i32_0 : i32, i32
  }
  func.func @transform_8(%arg0: i32) -> (i32, i32) {
    %c0_i32 = arith.constant 0 : i32
    %c0_i32_0 = arith.constant 0 : i32
    %c0_i32_1 = arith.constant 0 : i32
    return %c0_i32, %c0_i32_0 : i32, i32
  }
  func.func @transform_9(%arg0: i32) -> (i32, i32) {
    %c0_i32 = arith.constant 0 : i32
    %c0_i32_0 = arith.constant 0 : i32
    %c0_i32_1 = arith.constant 0 : i32
    return %c0_i32, %c0_i32_0 : i32, i32
  }
  func.func @transform_10(%arg0: i32) -> (i32, i32) {
    %c0_i32 = arith.constant 0 : i32
    %c0_i32_0 = arith.constant 0 : i32
    %c0_i32_1 = arith.constant 0 : i32
    return %c0_i32, %c0_i32_0 : i32, i32
  }
  func.func @transform_11(%arg0: i32) -> (i32, i32) {
    %c0_i32 = arith.constant 0 : i32
    %c0_i32_0 = arith.constant 0 : i32
    %c0_i32_1 = arith.constant 0 : i32
    return %c0_i32, %c0_i32_0 : i32, i32
  }
  func.func @transform_12(%arg0: i32) -> (i32, i32) {
    %c0_i32 = arith.constant 0 : i32
    %c0_i32_0 = arith.constant 0 : i32
    %c0_i32_1 = arith.constant 0 : i32
    return %c0_i32, %c0_i32_0 : i32, i32
  }
  func.func @transform_13(%arg0: i32) -> (i32, i32) {
    %c0_i32 = arith.constant 0 : i32
    %c0_i32_0 = arith.constant 0 : i32
    return %arg0, %c0_i32 : i32, i32
  }
}

</mosaic_0001>

<llo_original>
// kernel: actor_forward.1
$region0: #{actor_forward.1}
  #allocation0 [shape = 'u32[]', space=smem, size = 0x4, offset = 0x4, fixed_abs, tag = 'smem constant byte address 0x4 - core index']
  #allocation1 [shape = 'u32[144,128]{1,0:T(1,128)}', space=vmem, size = 0x12000, scoped, tag = 'internal scratch']
  %s0 = inlined_call_operand.vmem [shape: f32[8,24], index: 0, kind: input, shape index: {}]
  %s1 = inlined_call_operand.vmem [shape: f32[24,96], index: 1, kind: input, shape index: {}]
  %s2 = inlined_call_operand.vmem [shape: f32[1,96], index: 2, kind: input, shape index: {}]
  %s3 = inlined_call_operand.vmem [shape: f32[1,96], index: 3, kind: input, shape index: {}]
  %s4 = inlined_call_operand.vmem [shape: f32[1,96], index: 4, kind: input, shape index: {}]
  %s5 = inlined_call_operand.hbm [shape: f32[96,192], index: 5, kind: input, shape index: {}]
  %s6 = inlined_call_operand.vmem [shape: f32[1,192], index: 6, kind: input, shape index: {}]
  %s7 = inlined_call_operand.hbm [shape: f32[192,96], index: 7, kind: input, shape index: {}]
  %s8 = inlined_call_operand.vmem [shape: f32[1,96], index: 8, kind: input, shape index: {}]
  %s9 = inlined_call_operand.vmem [shape: f32[1,96], index: 9, kind: input, shape index: {}]
  %s10 = inlined_call_operand.vmem [shape: f32[1,96], index: 10, kind: input, shape index: {}]
  %s11 = inlined_call_operand.vmem [shape: f32[96,4], index: 11, kind: input, shape index: {}]
  %s12 = inlined_call_operand.vmem [shape: f32[1,4], index: 12, kind: input, shape index: {}]
  %s13 = inlined_call_operand.vmem [shape: f32[8,4], index: 13, kind: output, shape index: {}]
  %s14 = sld [smem:[#allocation0]]
  $region70: #{actor_forward.1} parent=0
    _
  %s16 = ssub.s32 1, %s14
  %s17 = scalar_select 0, %s16, %s14
  $region1: #{actor_forward.1} parent=0
    #allocation2 [shape = 'u8[98304]{0}', space=vmem, size = 0x18000, scoped, tag = 'input window, operand 5, single buffered']
    #allocation3 [shape = 's32[1]{0}', space=sflag, size = 0x4, scoped, tag = 'scoped memory for actor_forward.1']
    #allocation4 [shape = 'u8[98304]{0}', space=vmem, size = 0x18000, scoped, tag = 'input window, operand 7, single buffered']
    #allocation5 [shape = 's32[1]{0}', space=sflag, size = 0x4, scoped, tag = 'scoped memory for actor_forward.1']
    %18 = vsyncpa [#allocation3], 0
    %19 = vsyncpa [#allocation5], 0
    // Predicated region
    $region2: #{actor_forward.1} parent=1 // pred_check
      _
    $region3: #{actor_forward.1} parent=1 // pred_check_branch
      %21 = sbr.rel (0) target = $region5
    $region4: #{actor_forward.1} parent=1 // pred_region
      _
    $region5: #{actor_forward.1} parent=1 // pred_fallthru
      _
    // Predicated region
    $region6: #{actor_forward.1} parent=1 // pred_check
      _
    $region7: #{actor_forward.1} parent=1 // pred_check_branch
      %23 = sbr.rel (0) target = $region9
    $region8: #{actor_forward.1} parent=1 // pred_region
      _
    $region9: #{actor_forward.1} parent=1 // pred_fallthru
      _
    // Predicated region
    $region10: #{actor_forward.1} parent=1 // pred_check
      _
    $region11: #{actor_forward.1} parent=1 // pred_check_branch
      %25 = sbr.rel (0) target = $region13
    $region12: #{actor_forward.1} parent=1 // pred_region
      _
    $region13: #{actor_forward.1} parent=1 // pred_fallthru
      _
    // Predicated region
    $region14: #{actor_forward.1} parent=1 // pred_check
      _
    $region15: #{actor_forward.1} parent=1 // pred_check_branch
      %27 = sbr.rel (0) target = $region17
    $region16: #{actor_forward.1} parent=1 // pred_region
      _
    $region17: #{actor_forward.1} parent=1 // pred_fallthru
      _
    // Predicated region
    $region18: #{actor_forward.1} parent=1 // pred_check
      _
    $region19: #{actor_forward.1} parent=1 // pred_check_branch
      %29 = sbr.rel (0) target = $region21
    $region20: #{actor_forward.1} parent=1 // pred_region
      _
    $region21: #{actor_forward.1} parent=1 // pred_fallthru
      _
    // Predicated region
    $region22: #{actor_forward.1} parent=1 // pred_check
      _
    $region23: #{actor_forward.1} parent=1 // pred_check_branch
      %31 = sbr.rel (0) target = $region25
    $region24: #{actor_forward.1} parent=1 // pred_region
      %s33 = ssub.s32 3072, 3072
      %34 = vsyncadd [#allocation3], %s33
      %s35 = sshll.u32 [#allocation2], 4
      %s36 = int_to_ptr.vmem [resolvable:$true] %s35
      %41 = dma.hbm_to_vmem [thread:$0]  %s5, 3072, %s36, [#allocation3], 256, 256, 16
    $region25: #{actor_forward.1} parent=1 // pred_fallthru
      _
    // Predicated region
    $region26: #{actor_forward.1} parent=1 // pred_check
      _
    $region27: #{actor_forward.1} parent=1 // pred_check_branch
      %43 = sbr.rel (0) target = $region29
    $region28: #{actor_forward.1} parent=1 // pred_region
      _
    $region29: #{actor_forward.1} parent=1 // pred_fallthru
      _
    // Predicated region
    $region30: #{actor_forward.1} parent=1 // pred_check
      _
    $region31: #{actor_forward.1} parent=1 // pred_check_branch
      %45 = sbr.rel (0) target = $region33
    $region32: #{actor_forward.1} parent=1 // pred_region
      %s47 = ssub.s32 3072, 3072
      %48 = vsyncadd [#allocation5], %s47
      %s49 = sshll.u32 [#allocation4], 4
      %s50 = int_to_ptr.vmem [resolvable:$true] %s49
      %55 = dma.hbm_to_vmem [thread:$0]  %s7, 3072, %s50, [#allocation5], 128, 128, 8
    $region33: #{actor_forward.1} parent=1 // pred_fallthru
      _
    // Predicated region
    $region34: #{actor_forward.1} parent=1 // pred_check
      _
    $region35: #{actor_forward.1} parent=1 // pred_check_branch
      %57 = sbr.rel (0) target = $region37
    $region36: #{actor_forward.1} parent=1 // pred_region
      _
    $region37: #{actor_forward.1} parent=1 // pred_fallthru
      _
    // Predicated region
    $region38: #{actor_forward.1} parent=1 // pred_check
      _
    $region39: #{actor_forward.1} parent=1 // pred_check_branch
      %59 = sbr.rel (0) target = $region41
    $region40: #{actor_forward.1} parent=1 // pred_region
      _
    $region41: #{actor_forward.1} parent=1 // pred_fallthru
      _
    // Predicated region
    $region42: #{actor_forward.1} parent=1 // pred_check
      _
    $region43: #{actor_forward.1} parent=1 // pred_check_branch
      %61 = sbr.rel (0) target = $region45
    $region44: #{actor_forward.1} parent=1 // pred_region
      _
    $region45: #{actor_forward.1} parent=1 // pred_fallthru
      _
    // Predicated region
    $region46: #{actor_forward.1} parent=1 // pred_check
      _
    $region47: #{actor_forward.1} parent=1 // pred_check_branch
      %63 = sbr.rel (0) target = $region49
    $region48: #{actor_forward.1} parent=1 // pred_region
      _
    $region49: #{actor_forward.1} parent=1 // pred_fallthru
      _
    // Predicated region
    $region50: #{actor_forward.1} parent=1 // pred_check
      _
    $region51: #{actor_forward.1} parent=1 // pred_check_branch
      %65 = sbr.rel (0) target = $region53
    $region52: #{actor_forward.1} parent=1 // pred_region
      _
    $region53: #{actor_forward.1} parent=1 // pred_fallthru
      _
    // Predicated region
    $region54: #{actor_forward.1} parent=1 // pred_check
      _
    $region55: #{actor_forward.1} parent=1 // pred_check_branch
      %67 = sbr.rel (0) target = $region57
    $region56: #{actor_forward.1} parent=1 // pred_region
      %68 = dma.done [#allocation3], 3072
    $region57: #{actor_forward.1} parent=1 // pred_fallthru
      _
    // Predicated region
    $region58: #{actor_forward.1} parent=1 // pred_check
      _
    $region59: #{actor_forward.1} parent=1 // pred_check_branch
      %70 = sbr.rel (0) target = $region61
    $region60: #{actor_forward.1} parent=1 // pred_region
      %71 = dma.done [#allocation5], 3072
    $region61: #{actor_forward.1} parent=1 // pred_fallthru
      _
    %v72 = vld [vmem:[%s0] sm:$0xff]
    %v73 = vld [vmem:[%s1] sm:$0xff]
    %v74 = vld [vmem:[%s1 + $0x8] sm:$0xff]
    %v75 = vld [vmem:[%s1 + $0x10] sm:$0xff]
    %v76 = vld [vmem:[%s2] sm:$0x1]
    %v78 = vlaneseq
    %v79 = vshrl.u32 %v78, 7
    %v80 = vsub.s32 0, %v79
    %v81 = vrot.slane %v76, %v80
    %vm83 = vcmask 195584
    %v85 = vsel %vm83, %v72, 0
    %87 = vmatprep.subr.mxu0 0.0
    %88 = vmatpush1.msra.mxu0 %v73
    %89 = vmatprep.subr.mxu0 0.0
    %90 = vmatpush1.msra.mxu0 %v74
    %91 = vmatprep.subr.mxu0 0.0
    %92 = vmatpush1.msra.mxu0 %v75
    %93 = vmatprep.subr.mxu0 0.0
    %94 = vmatpush1.msra.mxu0 0.0
    %95 = vmatprep.subr.mxu0 0.0
    %96 = vmatpush1.msra.mxu0 0.0
    %97 = vmatprep.subr.mxu0 0.0
    %98 = vmatpush1.msra.mxu0 0.0
    %99 = vmatprep.subr.mxu0 0.0
    %100 = vmatpush1.msra.mxu0 0.0
    %101 = vmatprep.subr.mxu0 0.0
    %102 = vmatpush1.msra.mxu0 0.0
    %103 = vmatprep.subr.mxu0 0.0
    %104 = vmatpush1.msra.mxu0 0.0
    %105 = vmatprep.subr.mxu0 0.0
    %106 = vmatpush1.msra.mxu0 0.0
    %107 = vmatprep.subr.mxu0 0.0
    %108 = vmatpush1.msra.mxu0 0.0
    %109 = vmatprep.subr.mxu0 0.0
    %110 = vmatpush1.msra.mxu0 0.0
    %111 = vmatprep.subr.mxu0 0.0
    %112 = vmatpush1.msra.mxu0 0.0
    %113 = vmatprep.subr.mxu0 0.0
    %114 = vmatpush1.msra.mxu0 0.0
    %115 = vmatprep.subr.mxu0 0.0
    %116 = vmatpush1.msra.mxu0 0.0
    %117 = vmatprep.subr.mxu0 0.0
    %118 = vmatpush1.msra.mxu0 0.0
    %119 = vmatprep.subr.mxu0 0.0
    %120 = vmatpush1.msra.mxu0 0.0
    %121 = vmatprep.subr.mxu0 0.0
    %122 = vmatpush1.msra.mxu0 0.0
    %123 = vmatprep.subr.mxu0 0.0
    %124 = vmatpush1.msra.mxu0 0.0
    %125 = vmatprep.subr.mxu0 0.0
    %126 = vmatpush1.msra.mxu0 0.0
    %127 = vmatprep.subr.mxu0 0.0
    %128 = vmatpush1.msra.mxu0 0.0
    %129 = vmatprep.subr.mxu0 0.0
    %130 = vmatpush1.msra.mxu0 0.0
    %131 = vmatprep.subr.mxu0 0.0
    %132 = vmatpush1.msra.mxu0 0.0
    %133 = vmatprep.subr.mxu0 0.0
    %134 = vmatpush1.msra.mxu0 0.0
    %135 = vmatprep.subr.mxu0 0.0
    %136 = vmatpush1.msra.mxu0 0.0
    %137 = vmatprep.subr.mxu0 0.0
    %138 = vmatpush1.msra.mxu0 0.0
    %139 = vmatprep.subr.mxu0 0.0
    %140 = vmatpush1.msra.mxu0 0.0
    %141 = vmatprep.subr.mxu0 0.0
    %142 = vmatpush1.msra.mxu0 0.0
    %143 = vmatprep.subr.mxu0 0.0
    %144 = vmatpush1.msra.mxu0 0.0
    %145 = vmatprep.subr.mxu0 0.0
    %146 = vmatpush1.msra.mxu0 0.0
    %147 = vmatprep.subr.mxu0 0.0
    %148 = vmatpush1.msra.mxu0 0.0
    %149 = vmatprep.subr.mxu0 0.0
    %150 = vmatpush1.msra.mxu0 0.0
    %151 = vmatprep.mubr.f32.mxu0 0.0
    %152 = vmatmul.mubr.f32.gmra.mrb[0].mxu0 %v85
    %v153 = vpop.f32.mrb[0].mxu0
    %v154 = vadd.f32 %v81, %v153
    %v155 = vpop.f32.mrb[0].mxu0
    %156 = vdwg.mxu0
    %v157 = vld [vmem:[%s3] sm:$0x1]
    %v158 = vld [vmem:[%s4] sm:$0x1]
    %vm159 = vcmask 785408
    %v160 = vsel %vm159, %v154, 0.0
    %161 = vadd.xlane.f32.xlu0 %v160
    %v162 = vpop.xlane.xlu0 %161
    %v163 = vrcp.pop 96.0
    %v164 = vmul.f32 %v162, %v163
    %v165 = vsub.f32 %v154, %v164
    %v166 = vmul.f32 %v165, %v165
    %v167 = vsel %vm159, %v166, 0.0
    %168 = vadd.xlane.f32.xlu0 %v167
    %v169 = vpop.xlane.xlu0 %168
    %v170 = vmul.f32 %v169, %v163
    %v171 = vadd.f32 %v170, 1e-05
    %v172 = vrsqrt.pop %v171
    %v173 = vmul.f32 %v165, %v172
    %v175 = vlaneseq
    %v176 = vshrl.u32 %v175, 7
    %v177 = vsub.s32 0, %v176
    %v178 = vrot.slane %v157, %v177
    %v180 = vmul.f32 %v173, %v178
    %v182 = vlaneseq
    %v183 = vshrl.u32 %v182, 7
    %v184 = vsub.s32 0, %v183
    %v185 = vrot.slane %v158, %v184
    %v187 = vadd.f32 %v180, %v185
    %v188 = vtanh.pop %v187
    %v189 = vld [vmem:[#allocation2] sm:$0xff]
    %v190 = vld [vmem:[#allocation2 + $0x8] sm:$0xff]
    %v191 = vld [vmem:[#allocation2 + $0x10] sm:$0xff]
    %v192 = vld [vmem:[#allocation2 + $0x18] sm:$0xff]
    %v193 = vld [vmem:[#allocation2 + $0x20] sm:$0xff]
    %v194 = vld [vmem:[#allocation2 + $0x28] sm:$0xff]
    %v195 = vld [vmem:[#allocation2 + $0x30] sm:$0xff]
    %v196 = vld [vmem:[#allocation2 + $0x38] sm:$0xff]
    %v197 = vld [vmem:[#allocation2 + $0x40] sm:$0xff]
    %v198 = vld [vmem:[#allocation2 + $0x48] sm:$0xff]
    %v199 = vld [vmem:[#allocation2 + $0x50] sm:$0xff]
    %v200 = vld [vmem:[#allocation2 + $0x58] sm:$0xff]
    %v201 = vld [vmem:[#allocation2 + $0x60] sm:$0xff]
    %v202 = vld [vmem:[#allocation2 + $0x68] sm:$0xff]
    %v203 = vld [vmem:[#allocation2 + $0x70] sm:$0xff]
    %v204 = vld [vmem:[#allocation2 + $0x78] sm:$0xff]
    %v205 = vld [vmem:[#allocation2 + $0x80] sm:$0xff]
    %v206 = vld [vmem:[#allocation2 + $0x88] sm:$0xff]
    %v207 = vld [vmem:[#allocation2 + $0x90] sm:$0xff]
    %v208 = vld [vmem:[#allocation2 + $0x98] sm:$0xff]
    %v209 = vld [vmem:[#allocation2 + $0xa0] sm:$0xff]
    %v210 = vld [vmem:[#allocation2 + $0xa8] sm:$0xff]
    %v211 = vld [vmem:[#allocation2 + $0xb0] sm:$0xff]
    %v212 = vld [vmem:[#allocation2 + $0xb8] sm:$0xff]
    %v213 = vld [vmem:[%s6] sm:$0x3]
    %v215 = vlaneseq
    %v216 = vshrl.u32 %v215, 7
    %v217 = vsub.s32 0, %v216
    %v218 = vrot.slane %v213, %v217
    %v219 = vlaneseq
    %v220 = vshrl.u32 %v219, 7
    %v221 = vsub.s32 1, %v220
    %v222 = vrot.slane %v213, %v221
    %v226 = vsel %vm159, %v188, 0
    %228 = vmatprep.subr.mxu0 %v190
    %229 = vmatpush1.msra.mxu0 %v189
    %230 = vmatprep.subr.mxu0 %v192
    %231 = vmatpush1.msra.mxu0 %v191
    %232 = vmatprep.subr.mxu0 %v194
    %233 = vmatpush1.msra.mxu0 %v193
    %234 = vmatprep.subr.mxu0 %v196
    %235 = vmatpush1.msra.mxu0 %v195
    %236 = vmatprep.subr.mxu0 %v198
    %237 = vmatpush1.msra.mxu0 %v197
    %238 = vmatprep.subr.mxu0 %v200
    %239 = vmatpush1.msra.mxu0 %v199
    %240 = vmatprep.subr.mxu0 %v202
    %241 = vmatpush1.msra.mxu0 %v201
    %242 = vmatprep.subr.mxu0 %v204
    %243 = vmatpush1.msra.mxu0 %v203
    %244 = vmatprep.subr.mxu0 %v206
    %245 = vmatpush1.msra.mxu0 %v205
    %246 = vmatprep.subr.mxu0 %v208
    %247 = vmatpush1.msra.mxu0 %v207
    %248 = vmatprep.subr.mxu0 %v210
    %249 = vmatpush1.msra.mxu0 %v209
    %250 = vmatprep.subr.mxu0 %v212
    %251 = vmatpush1.msra.mxu0 %v211
    %252 = vmatprep.subr.mxu0 0.0
    %253 = vmatpush1.msra.mxu0 0.0
    %254 = vmatprep.subr.mxu0 0.0
    %255 = vmatpush1.msra.mxu0 0.0
    %256 = vmatprep.subr.mxu0 0.0
    %257 = vmatpush1.msra.mxu0 0.0
    %258 = vmatprep.subr.mxu0 0.0
    %259 = vmatpush1.msra.mxu0 0.0
    %260 = vmatprep.subr.mxu0 0.0
    %261 = vmatpush1.msra.mxu0 0.0
    %262 = vmatprep.subr.mxu0 0.0
    %263 = vmatpush1.msra.mxu0 0.0
    %264 = vmatprep.subr.mxu0 0.0
    %265 = vmatpush1.msra.mxu0 0.0
    %266 = vmatprep.subr.mxu0 0.0
    %267 = vmatpush1.msra.mxu0 0.0
    %268 = vmatprep.subr.mxu0 0.0
    %269 = vmatpush1.msra.mxu0 0.0
    %270 = vmatprep.subr.mxu0 0.0
    %271 = vmatpush1.msra.mxu0 0.0
    %272 = vmatprep.subr.mxu0 0.0
    %273 = vmatpush1.msra.mxu0 0.0
    %274 = vmatprep.subr.mxu0 0.0
    %275 = vmatpush1.msra.mxu0 0.0
    %276 = vmatprep.subr.mxu0 0.0
    %277 = vmatpush1.msra.mxu0 0.0
    %278 = vmatprep.subr.mxu0 0.0
    %279 = vmatpush1.msra.mxu0 0.0
    %280 = vmatprep.subr.mxu0 0.0
    %281 = vmatpush1.msra.mxu0 0.0
    %282 = vmatprep.subr.mxu0 0.0
    %283 = vmatpush1.msra.mxu0 0.0
    %284 = vmatprep.subr.mxu0 0.0
    %285 = vmatpush1.msra.mxu0 0.0
    %286 = vmatprep.subr.mxu0 0.0
    %287 = vmatpush1.msra.mxu0 0.0
    %288 = vmatprep.subr.mxu0 0.0
    %289 = vmatpush1.msra.mxu0 0.0
    %290 = vmatprep.subr.mxu0 0.0
    %291 = vmatpush1.msra.mxu0 0.0
    %292 = vmatprep.mubr.f32.mxu0 0.0
    %293 = vmatmul.mubr.f32.gmra.mrb[0].mxu0 %v226
    %v294 = vpop.f32.mrb[0].mxu0
    %v295 = vadd.f32 %v218, %v294
    %v296 = vpop.f32.mrb[0].mxu0
    %v297 = vadd.f32 %v222, %v296
    %298 = vdwg.mxu0
    %v299 = vmul.f32 %v295, 0.5
    %v300 = vmul.f32 %v297, 0.5
    %v301 = vmul.f32 %v295, 0.70710677
    %v302 = vmul.f32 %v297, 0.70710677
    %v303 = verf.f32.pop %v301
    %v304 = verf.f32.pop %v302
    %v305 = vadd.f32 %v303, 1.0
    %v306 = vadd.f32 %v304, 1.0
    %v307 = vmul.f32 %v299, %v305
    %v308 = vmul.f32 %v300, %v306
    %v309 = vld [vmem:[#allocation4] sm:$0xff]
    %v310 = vld [vmem:[#allocation4 + $0x8] sm:$0xff]
    %v311 = vld [vmem:[#allocation4 + $0x10] sm:$0xff]
    %v312 = vld [vmem:[#allocation4 + $0x18] sm:$0xff]
    %v313 = vld [vmem:[#allocation4 + $0x20] sm:$0xff]
    %v314 = vld [vmem:[#allocation4 + $0x28] sm:$0xff]
    %v315 = vld [vmem:[#allocation4 + $0x30] sm:$0xff]
    %v316 = vld [vmem:[#allocation4 + $0x38] sm:$0xff]
    %v317 = vld [vmem:[#allocation4 + $0x40] sm:$0xff]
    %v318 = vld [vmem:[#allocation4 + $0x48] sm:$0xff]
    %v319 = vld [vmem:[#allocation4 + $0x50] sm:$0xff]
    %v320 = vld [vmem:[#allocation4 + $0x58] sm:$0xff]
    %v321 = vld [vmem:[#allocation4 + $0x60] sm:$0xff]
    %v322 = vld [vmem:[#allocation4 + $0x68] sm:$0xff]
    %v323 = vld [vmem:[#allocation4 + $0x70] sm:$0xff]
    %v324 = vld [vmem:[#allocation4 + $0x78] sm:$0xff]
    %v325 = vld [vmem:[#allocation4 + $0x80] sm:$0xff]
    %v326 = vld [vmem:[#allocation4 + $0x88] sm:$0xff]
    %v327 = vld [vmem:[#allocation4 + $0x90] sm:$0xff]
    %v328 = vld [vmem:[#allocation4 + $0x98] sm:$0xff]
    %v329 = vld [vmem:[#allocation4 + $0xa0] sm:$0xff]
    %v330 = vld [vmem:[#allocation4 + $0xa8] sm:$0xff]
    %v331 = vld [vmem:[#allocation4 + $0xb0] sm:$0xff]
    %v332 = vld [vmem:[#allocation4 + $0xb8] sm:$0xff]
    %v333 = vld [vmem:[%s8] sm:$0x1]
    %v335 = vlaneseq
    %v336 = vshrl.u32 %v335, 7
    %v337 = vsub.s32 0, %v336
    %v338 = vrot.slane %v333, %v337
    %vm340 = vcmask 523264
    %v342 = vsel %vm340, %v308, 0
    %344 = vmatprep.subr.mxu0 0.0
    %345 = vmatpush1.msra.mxu0 %v309
    %346 = vmatprep.subr.mxu0 0.0
    %347 = vmatpush1.msra.mxu0 %v310
    %348 = vmatprep.subr.mxu0 0.0
    %349 = vmatpush1.msra.mxu0 %v311
    %350 = vmatprep.subr.mxu0 0.0
    %351 = vmatpush1.msra.mxu0 %v312
    %352 = vmatprep.subr.mxu0 0.0
    %353 = vmatpush1.msra.mxu0 %v313
    %354 = vmatprep.subr.mxu0 0.0
    %355 = vmatpush1.msra.mxu0 %v314
    %356 = vmatprep.subr.mxu0 0.0
    %357 = vmatpush1.msra.mxu0 %v315
    %358 = vmatprep.subr.mxu0 0.0
    %359 = vmatpush1.msra.mxu0 %v316
    %360 = vmatprep.subr.mxu0 0.0
    %361 = vmatpush1.msra.mxu0 %v317
    %362 = vmatprep.subr.mxu0 0.0
    %363 = vmatpush1.msra.mxu0 %v318
    %364 = vmatprep.subr.mxu0 0.0
    %365 = vmatpush1.msra.mxu0 %v319
    %366 = vmatprep.subr.mxu0 0.0
    %367 = vmatpush1.msra.mxu0 %v320
    %368 = vmatprep.subr.mxu0 0.0
    %369 = vmatpush1.msra.mxu0 %v321
    %370 = vmatprep.subr.mxu0 0.0
    %371 = vmatpush1.msra.mxu0 %v322
    %372 = vmatprep.subr.mxu0 0.0
    %373 = vmatpush1.msra.mxu0 %v323
    %374 = vmatprep.subr.mxu0 0.0
    %375 = vmatpush1.msra.mxu0 %v324
    %376 = vmatprep.subr.mxu0 0.0
    %377 = vmatpush1.msra.mxu0 %v325
    %378 = vmatprep.subr.mxu0 0.0
    %379 = vmatpush1.msra.mxu0 %v326
    %380 = vmatprep.subr.mxu0 0.0
    %381 = vmatpush1.msra.mxu0 %v327
    %382 = vmatprep.subr.mxu0 0.0
    %383 = vmatpush1.msra.mxu0 %v328
    %384 = vmatprep.subr.mxu0 0.0
    %385 = vmatpush1.msra.mxu0 %v329
    %386 = vmatprep.subr.mxu0 0.0
    %387 = vmatpush1.msra.mxu0 %v330
    %388 = vmatprep.subr.mxu0 0.0
    %389 = vmatpush1.msra.mxu0 %v331
    %390 = vmatprep.subr.mxu0 0.0
    %391 = vmatpush1.msra.mxu0 %v332
    %392 = vmatprep.subr.mxu0 0.0
    %393 = vmatpush1.msra.mxu0 0.0
    %394 = vmatprep.subr.mxu0 0.0
    %395 = vmatpush1.msra.mxu0 0.0
    %396 = vmatprep.subr.mxu0 0.0
    %397 = vmatpush1.msra.mxu0 0.0
    %398 = vmatprep.subr.mxu0 0.0
    %399 = vmatpush1.msra.mxu0 0.0
    %400 = vmatprep.subr.mxu0 0.0
    %401 = vmatpush1.msra.mxu0 0.0
    %402 = vmatprep.subr.mxu0 0.0
    %403 = vmatpush1.msra.mxu0 0.0
    %404 = vmatprep.subr.mxu0 0.0
    %405 = vmatpush1.msra.mxu0 0.0
    %406 = vmatprep.subr.mxu0 0.0
    %407 = vmatpush1.msra.mxu0 0.0
    %408 = vmatprep.mubr.f32.mxu0 %v342
    %409 = vmatmul.mubr.f32.gmra.mrb[0].mxu0 %v307
    %v410 = vpop.f32.mrb[0].mxu0
    %v411 = vadd.f32 %v338, %v410
    %v412 = vpop.f32.mrb[0].mxu0
    %413 = vdwg.mxu0
    %v414 = vadd.f32 %v188, %v411
    %v415 = vld [vmem:[%s9] sm:$0x1]
    %v416 = vld [vmem:[%s10] sm:$0x1]
    %v417 = vsel %vm159, %v414, 0.0
    %418 = vadd.xlane.f32.xlu0 %v417
    %v419 = vpop.xlane.xlu0 %418
    %v420 = vmul.f32 %v419, %v163
    %v421 = vsub.f32 %v414, %v420
    %v422 = vmul.f32 %v421, %v421
    %v423 = vsel %vm159, %v422, 0.0
    %424 = vadd.xlane.f32.xlu0 %v423
    %v425 = vpop.xlane.xlu0 %424
    %v426 = vmul.f32 %v425, %v163
    %v427 = vadd.f32 %v426, 1e-05
    %v428 = vrsqrt.pop %v427
    %v429 = vmul.f32 %v421, %v428
    %v431 = vlaneseq
    %v432 = vshrl.u32 %v431, 7
    %v433 = vsub.s32 0, %v432
    %v434 = vrot.slane %v415, %v433
    %v436 = vmul.f32 %v429, %v434
    %v438 = vlaneseq
    %v439 = vshrl.u32 %v438, 7
    %v440 = vsub.s32 0, %v439
    %v441 = vrot.slane %v416, %v440
    %v443 = vadd.f32 %v436, %v441
    %v444 = vld [vmem:[%s11] sm:$0xff]
    %v445 = vld [vmem:[%s11 + $0x8] sm:$0xff]
    %v446 = vld [vmem:[%s11 + $0x10] sm:$0xff]
    %v447 = vld [vmem:[%s11 + $0x18] sm:$0xff]
    %v448 = vld [vmem:[%s11 + $0x20] sm:$0xff]
    %v449 = vld [vmem:[%s11 + $0x28] sm:$0xff]
    %v450 = vld [vmem:[%s11 + $0x30] sm:$0xff]
    %v451 = vld [vmem:[%s11 + $0x38] sm:$0xff]
    %v452 = vld [vmem:[%s11 + $0x40] sm:$0xff]
    %v453 = vld [vmem:[%s11 + $0x48] sm:$0xff]
    %v454 = vld [vmem:[%s11 + $0x50] sm:$0xff]
    %v455 = vld [vmem:[%s11 + $0x58] sm:$0xff]
    %v456 = vld [vmem:[%s12] sm:$0x1]
    %v458 = vlaneseq
    %v459 = vshrl.u32 %v458, 7
    %v460 = vsub.s32 0, %v459
    %v461 = vrot.slane %v456, %v460
    %v464 = vsel %vm159, %v443, 0
    %466 = vmatprep.subr.mxu0 0.0
    %467 = vmatpush1.msra.mxu0 %v444
    %468 = vmatprep.subr.mxu0 0.0
    %469 = vmatpush1.msra.mxu0 %v445
    %470 = vmatprep.subr.mxu0 0.0
    %471 = vmatpush1.msra.mxu0 %v446
    %472 = vmatprep.subr.mxu0 0.0
    %473 = vmatpush1.msra.mxu0 %v447
    %474 = vmatprep.subr.mxu0 0.0
    %475 = vmatpush1.msra.mxu0 %v448
    %476 = vmatprep.subr.mxu0 0.0
    %477 = vmatpush1.msra.mxu0 %v449
    %478 = vmatprep.subr.mxu0 0.0
    %479 = vmatpush1.msra.mxu0 %v450
    %480 = vmatprep.subr.mxu0 0.0
    %481 = vmatpush1.msra.mxu0 %v451
    %482 = vmatprep.subr.mxu0 0.0
    %483 = vmatpush1.msra.mxu0 %v452
    %484 = vmatprep.subr.mxu0 0.0
    %485 = vmatpush1.msra.mxu0 %v453
    %486 = vmatprep.subr.mxu0 0.0
    %487 = vmatpush1.msra.mxu0 %v454
    %488 = vmatprep.subr.mxu0 0.0
    %489 = vmatpush1.msra.mxu0 %v455
    %490 = vmatprep.subr.mxu0 0.0
    %491 = vmatpush1.msra.mxu0 0.0
    %492 = vmatprep.subr.mxu0 0.0
    %493 = vmatpush1.msra.mxu0 0.0
    %494 = vmatprep.subr.mxu0 0.0
    %495 = vmatpush1.msra.mxu0 0.0
    %496 = vmatprep.subr.mxu0 0.0
    %497 = vmatpush1.msra.mxu0 0.0
    %498 = vmatprep.subr.mxu0 0.0
    %499 = vmatpush1.msra.mxu0 0.0
    %500 = vmatprep.subr.mxu0 0.0
    %501 = vmatpush1.msra.mxu0 0.0
    %502 = vmatprep.subr.mxu0 0.0
    %503 = vmatpush1.msra.mxu0 0.0
    %504 = vmatprep.subr.mxu0 0.0
    %505 = vmatpush1.msra.mxu0 0.0
    %506 = vmatprep.subr.mxu0 0.0
    %507 = vmatpush1.msra.mxu0 0.0
    %508 = vmatprep.subr.mxu0 0.0
    %509 = vmatpush1.msra.mxu0 0.0
    %510 = vmatprep.subr.mxu0 0.0
    %511 = vmatpush1.msra.mxu0 0.0
    %512 = vmatprep.subr.mxu0 0.0
    %513 = vmatpush1.msra.mxu0 0.0
    %514 = vmatprep.subr.mxu0 0.0
    %515 = vmatpush1.msra.mxu0 0.0
    %516 = vmatprep.subr.mxu0 0.0
    %517 = vmatpush1.msra.mxu0 0.0
    %518 = vmatprep.subr.mxu0 0.0
    %519 = vmatpush1.msra.mxu0 0.0
    %520 = vmatprep.subr.mxu0 0.0
    %521 = vmatpush1.msra.mxu0 0.0
    %522 = vmatprep.subr.mxu0 0.0
    %523 = vmatpush1.msra.mxu0 0.0
    %524 = vmatprep.subr.mxu0 0.0
    %525 = vmatpush1.msra.mxu0 0.0
    %526 = vmatprep.subr.mxu0 0.0
    %527 = vmatpush1.msra.mxu0 0.0
    %528 = vmatprep.subr.mxu0 0.0
    %529 = vmatpush1.msra.mxu0 0.0
    %530 = vmatprep.mubr.f32.mxu0 0.0
    %531 = vmatmul.mubr.f32.gmra.mrb[0].mxu0 %v464
    %v532 = vpop.f32.mrb[0].mxu0
    %v533 = vadd.f32 %v461, %v532
    %v534 = vpop.f32.mrb[0].mxu0
    %535 = vdwg.mxu0
    %v536 = vtanh.pop %v533
    %vm537 = vcmask 31744
    %538 = vst.msk [vmem:[%s13] sm:$0xff] %vm537, %v536
    // Predicated region
    $region62: #{actor_forward.1} parent=1 // pred_check
      _
    $region63: #{actor_forward.1} parent=1 // pred_check_branch
      %540 = sbr.rel (0) target = $region65
    $region64: #{actor_forward.1} parent=1 // pred_region
      _
    $region65: #{actor_forward.1} parent=1 // pred_fallthru
      _
    // Predicated region
    $region66: #{actor_forward.1} parent=1 // pred_check
      _
    $region67: #{actor_forward.1} parent=1 // pred_check_branch
      %542 = sbr.rel (0) target = $region69
    $region68: #{actor_forward.1} parent=1 // pred_region
      _
    $region69: #{actor_forward.1} parent=1 // pred_fallthru
      _
    %543 = vsyncpa [#allocation3], 1
    %544 = vsyncpa [#allocation5], 1

</llo_original>
